<compile_context>
chip_gen: v6e
topology: v6e:2x2x1
jax: 0.10.0
libtpu: 0.0.40
codegen_flags: <defaults>
</compile_context>

<pallas_src>
import numpy as np
import jax
import jax.numpy as jnp
from jax.experimental import pallas as pl
from jax.experimental.pallas import tpu as pltpu

HIDDEN = 128
LANE = 128
SUBLANE = 8

# Conservative per-step working-set budget so the kernel fits the default scoped VMEM
# on every generation (v5e default is 16 MiB) without touching vmem_limit_bytes.
_VMEM_BUDGET_BYTES = 12 * 1024 * 1024


def _round_up(x, m):
    return ((x + m - 1) // m) * m


def _mlp_kernel(x_ref, w1_ref, w2_ref, w3_ref, b_ref, o_ref):
    # Packed biases (f32): row 0 -> b1, row 1 -> b2, row 2 -> b3 (lane-padded).
    n3 = o_ref.shape[1]
    b1 = b_ref[0:1, :HIDDEN]
    b2 = b_ref[1:2, :HIDDEN]
    b3 = b_ref[2:3, :n3]

    # Three MXU matmuls with f32 accumulation; bias add / ReLU stay f32 on the VPU.
    x = x_ref[...].astype(w1_ref.dtype)
    h1 = jnp.dot(x, w1_ref[...], preferred_element_type=jnp.float32) + b1
    h1 = jnp.maximum(h1, 0.0)
    h2 = jnp.dot(h1.astype(w2_ref.dtype), w2_ref[...],
                 preferred_element_type=jnp.float32) + b2
    h2 = jnp.maximum(h2, 0.0)
    q = jnp.dot(h2.astype(w3_ref.dtype), w3_ref[...],
                preferred_element_type=jnp.float32) + b3
    o_ref[...] = q.astype(o_ref.dtype)


def prepare_params(params, *, weights_dtype=jnp.bfloat16):
    """One-time packing of raw (in,out)-layout params for the kernel.

    Hoists the dtype casts, w3 lane padding and bias packing out of the per-call path.
    """
    action_dim = int(params["w3"].shape[1])
    out_pad = _round_up(action_dim, LANE)       # lane-dense output -> unmasked full vst
    b_lane = max(HIDDEN, out_pad)

    w1 = params["w1"].astype(weights_dtype)                      # (obs_dim, 128)
    w2 = params["w2"].astype(weights_dtype)                      # (128, 128)
    w3 = jnp.pad(params["w3"],
                 ((0, 0), (0, out_pad - action_dim))).astype(weights_dtype)

    b_all = jnp.zeros((SUBLANE, b_lane), jnp.float32)
    b_all = b_all.at[0, :HIDDEN].set(params["b1"].reshape(-1).astype(jnp.float32))
    b_all = b_all.at[1, :HIDDEN].set(params["b2"].reshape(-1).astype(jnp.float32))
    b_all = b_all.at[2, :action_dim].set(params["b3"].reshape(-1).astype(jnp.float32))

    return {"w1": w1, "w2": w2, "w3": w3, "b_all": b_all, "action_dim": action_dim}


def speaker_qnetwork_forward(x, params, *, batch_tile=None,
                             weights_dtype=jnp.bfloat16, return_padded=False):
    """x: (B, obs_dim).

    params: raw dict {w1 (obs,128), b1, w2 (128,128), b2, w3 (128,act), b3} stored
    (in, out), OR the output of prepare_params() (preferred: prepare once, reuse).

    batch_tile: rows per grid step. Default ~cdiv(B,2) capped at 4096 and at the VMEM
    budget, so large B always yields >=2 grid steps (keeps both v7x TCs busy).
    return_padded: if True, return the (B, 128-lane-padded) output and let the consumer
    mask, avoiding the trailing lane slice entirely.
    """
    if "b_all" not in params:
        params = prepare_params(params, weights_dtype=weights_dtype)

    w1, w2, w3, b_all = params["w1"], params["w2"], params["w3"], params["b_all"]
    action_dim = params["action_dim"]

    B, obs_dim = x.shape
    assert w1.shape[0] == obs_dim, "obs_dim mismatch between x and w1"
    out_pad = w3.shape[1]
    b_lane = b_all.shape[1]

    # --- choose batch_tile ------------------------------------------------------------
    x_bytes = jnp.dtype(x.dtype).itemsize
    w_bytes = jnp.dtype(w1.dtype).itemsize
    # VMEM-resident fixed cost (weights + biases, double-buffered by the pipeline).
    fixed = 2 * (obs_dim * HIDDEN + HIDDEN * HIDDEN + HIDDEN * out_pad) * w_bytes \
            + 2 * SUBLANE * b_lane * 4
    # Per-row cost: x block (x2 buffers) + out block (x2 buffers) + f32 intermediates.
    per_row = 2 * obs_dim * x_bytes + 2 * out_pad * 4 + 3 * HIDDEN * 4
    max_rows = max(SUBLANE, (_VMEM_BUDGET_BYTES - fixed) // per_row)
    max_rows = max(SUBLANE, (max_rows // SUBLANE) * SUBLANE)

    if batch_tile is None:
        # >= 2 grid steps whenever B is large enough (v7x megacore), capped at 4096 rows.
        batch_tile = min(_round_up(pl.cdiv(B, 2), SUBLANE), 4096)
    batch_tile = _round_up(int(batch_tile), SUBLANE)
    batch_tile = min(batch_tile, max_rows)
    if batch_tile >= B:
        batch_tile = B          # single full-extent block: always layout-legal

    grid = (pl.cdiv(B, batch_tile),)

    def const_spec(shape):
        # Weights / biases are small; keep full copies resident in VMEM (index never moves).
        return pl.BlockSpec(shape, lambda i: (0,) * len(shape))

    out = pl.pallas_call(
        _mlp_kernel,
        out_shape=jax.ShapeDtypeStruct((B, out_pad), jnp.float32),
        grid_spec=pltpu.PrefetchScalarGridSpec(
            num_scalar_prefetch=0,
            grid=grid,
            in_specs=[
                pl.BlockSpec((batch_tile, obs_dim), lambda i: (i, 0)),   # x tile (ragged tail ok)
                const_spec((obs_dim, HIDDEN)),                            # w1
                const_spec((HIDDEN, HIDDEN)),                             # w2
                const_spec((HIDDEN, out_pad)),                            # w3 (lane-padded)
                const_spec((SUBLANE, b_lane)),                            # packed biases
            ],
            out_specs=pl.BlockSpec((batch_tile, out_pad), lambda i: (i, 0)),
        ),
        compiler_params=pltpu.CompilerParams(
            dimension_semantics=("parallel",),   # batch tiles are independent
        ),
    )(x, w1, w2, w3, b_all)

    if return_padded:
        return out                      # (B, out_pad); consumer masks lanes >= action_dim
    return out[:, :action_dim]          # cheap lane slice only (no batch slice remains)


def init_params(key, obs_dim, action_dim):
    """Orthogonal init with gain sqrt(2), zero bias (matches PyTorch _init_weights)."""
    ortho = jax.nn.initializers.orthogonal(scale=float(np.sqrt(2.0)))
    k1, k2, k3 = jax.random.split(key, 3)
    return {
        # stored as (in, out) so the kernel can do x @ W
        "w1": ortho(k1, (obs_dim, HIDDEN), jnp.float32),
        "b1": jnp.zeros((HIDDEN,), jnp.float32),
        "w2": ortho(k2, (HIDDEN, HIDDEN), jnp.float32),
        "b2": jnp.zeros((HIDDEN,), jnp.float32),
        "w3": ortho(k3, (HIDDEN, action_dim), jnp.float32),
        "b3": jnp.zeros((action_dim,), jnp.float32),
    }


def _reference_forward(x, p):
    h1 = jnp.maximum(x @ p["w1"] + p["b1"], 0.0)
    h2 = jnp.maximum(h1 @ p["w2"] + p["b2"], 0.0)
    return h2 @ p["w3"] + p["b3"]


if __name__ == "__main__":
    key = jax.random.PRNGKey(0)
    kx, kp, kx2, kp2 = jax.random.split(key, 4)

    # Case 1: small shapes consistent with the module (obs_dim=16, action_dim=8, batch=8),
    # f32 weights path -> tight tolerance.
    batch, obs_dim, action_dim = 8, 16, 8
    params = init_params(kp, obs_dim, action_dim)
    x = jax.random.normal(kx, (batch, obs_dim), dtype=jnp.float32)

    out = jax.block_until_ready(
        speaker_qnetwork_forward(x, params, weights_dtype=jnp.float32))
    ref = _reference_forward(x, params)
    assert out.shape == (batch, action_dim)
    np.testing.assert_allclose(np.asarray(out), np.asarray(ref), rtol=1e-5, atol=1e-5)

    # Case 2: awkward dims, multi-step ragged grid, prepared (hoisted) bf16 params
    # -> looser tolerance (bf16 input rounding; accumulation is still f32).
    batch2, obs2, act2 = 300, 13, 5
    params2_raw = init_params(kp2, obs2, act2)
    params2 = prepare_params(params2_raw, weights_dtype=jnp.bfloat16)   # one-time prep
    x2 = jax.random.normal(kx2, (batch2, obs2), dtype=jnp.float32)
    out2 = jax.block_until_ready(
        speaker_qnetwork_forward(x2, params2, batch_tile=128))
    ref2 = _reference_forward(x2, params2_raw)
    assert out2.shape == (batch2, act2)
    np.testing.assert_allclose(np.asarray(out2), np.asarray(ref2), rtol=2e-2, atol=2e-2)

    print("KERNEL_OK")
</pallas_src>

<mosaic_0001>
module attributes {stable_mosaic.version = 11 : i64} {
  func.func @_mlp_kernel(%arg0: i32, %arg1: memref<8x16xf32, #tpu.memory_space<vmem>>, %arg2: memref<16x128xf32, #tpu.memory_space<vmem>>, %arg3: memref<128x128xf32, #tpu.memory_space<vmem>>, %arg4: memref<128x128xf32, #tpu.memory_space<vmem>>, %arg5: memref<8x128xf32, #tpu.memory_space<vmem>>, %arg6: memref<8x128xf32, #tpu.memory_space<vmem>>) attributes {dimension_semantics = [#tpu.dimension_semantics<parallel>], iteration_bounds = array<i64: 1>, scalar_prefetch = 0 : i64, scratch_operands = 0 : i64, tpu.core_type = #tpu.core_type<tc>, window_params = [{transform_indices = @transform_0, window_bounds = array<i64: 8, 16>}, {pipeline_mode = #tpu.pipeline_mode<synchronous>, transform_indices = @transform_1, window_bounds = array<i64: 16, 128>}, {pipeline_mode = #tpu.pipeline_mode<synchronous>, transform_indices = @transform_2, window_bounds = array<i64: 128, 128>}, {pipeline_mode = #tpu.pipeline_mode<synchronous>, transform_indices = @transform_3, window_bounds = array<i64: 128, 128>}, {pipeline_mode = #tpu.pipeline_mode<synchronous>, transform_indices = @transform_4, window_bounds = array<i64: 8, 128>}, {transform_indices = @transform_5, window_bounds = array<i64: 8, 128>}]} {
    %c0 = arith.constant 0 : index
    %c0_0 = arith.constant 0 : index
    %0 = vector.load %arg5[%c0, %c0_0] : memref<8x128xf32, #tpu.memory_space<vmem>>, vector<1x128xf32>
    %c1 = arith.constant 1 : index
    %c0_1 = arith.constant 0 : index
    %1 = vector.load %arg5[%c1, %c0_1] : memref<8x128xf32, #tpu.memory_space<vmem>>, vector<1x128xf32>
    %c2 = arith.constant 2 : index
    %c0_2 = arith.constant 0 : index
    %2 = vector.load %arg5[%c2, %c0_2] : memref<8x128xf32, #tpu.memory_space<vmem>>, vector<1x128xf32>
    %c0_3 = arith.constant 0 : index
    %c0_4 = arith.constant 0 : index
    %3 = vector.load %arg1[%c0_3, %c0_4] : memref<8x16xf32, #tpu.memory_space<vmem>>, vector<8x16xf32>
    %c0_5 = arith.constant 0 : index
    %c0_6 = arith.constant 0 : index
    %4 = vector.load %arg2[%c0_5, %c0_6] : memref<16x128xf32, #tpu.memory_space<vmem>>, vector<16x128xf32>
    %cst = arith.constant dense<0.000000e+00> : vector<8x128xf32>
    %5 = tpu.matmul %3, %4, %cst {dimension_numbers = #tpu.dot_dimension_numbers<[1], [0], [0], [1], [0, 0, 1, 1], [], []>} : vector<8x16xf32>, vector<16x128xf32>, vector<8x128xf32> -> vector<8x128xf32>
    %6 = vector.broadcast %0 : vector<1x128xf32> to vector<8x128xf32>
    %7 = arith.addf %5, %6 : vector<8x128xf32>
    %cst_7 = arith.constant 0.000000e+00 : f32
    %8 = vector.broadcast %cst_7 : f32 to vector<8x128xf32>
    %9 = arith.maximumf %7, %8 : vector<8x128xf32>
    %c0_8 = arith.constant 0 : index
    %c0_9 = arith.constant 0 : index
    %10 = vector.load %arg3[%c0_8, %c0_9] : memref<128x128xf32, #tpu.memory_space<vmem>>, vector<128x128xf32>
    %cst_10 = arith.constant dense<0.000000e+00> : vector<8x128xf32>
    %11 = tpu.matmul %9, %10, %cst_10 {dimension_numbers = #tpu.dot_dimension_numbers<[1], [0], [0], [1], [0, 0, 1, 1], [], []>} : vector<8x128xf32>, vector<128x128xf32>, vector<8x128xf32> -> vector<8x128xf32>
    %12 = vector.broadcast %1 : vector<1x128xf32> to vector<8x128xf32>
    %13 = arith.addf %11, %12 : vector<8x128xf32>
    %cst_11 = arith.constant 0.000000e+00 : f32
    %14 = vector.broadcast %cst_11 : f32 to vector<8x128xf32>
    %15 = arith.maximumf %13, %14 : vector<8x128xf32>
    %c0_12 = arith.constant 0 : index
    %c0_13 = arith.constant 0 : index
    %16 = vector.load %arg4[%c0_12, %c0_13] : memref<128x128xf32, #tpu.memory_space<vmem>>, vector<128x128xf32>
    %cst_14 = arith.constant dense<0.000000e+00> : vector<8x128xf32>
    %17 = tpu.matmul %15, %16, %cst_14 {dimension_numbers = #tpu.dot_dimension_numbers<[1], [0], [0], [1], [0, 0, 1, 1], [], []>} : vector<8x128xf32>, vector<128x128xf32>, vector<8x128xf32> -> vector<8x128xf32>
    %18 = vector.broadcast %2 : vector<1x128xf32> to vector<8x128xf32>
    %19 = arith.addf %17, %18 : vector<8x128xf32>
    %c0_15 = arith.constant 0 : index
    %c0_16 = arith.constant 0 : index
    %20 = vector.load %arg6[%c0_15, %c0_16] : memref<8x128xf32, #tpu.memory_space<vmem>>, vector<8x128xf32>
    tpu.vector_store %arg6[%c0_15, %c0_16], %19 {strides = array<i32>} : memref<8x128xf32, #tpu.memory_space<vmem>>, vector<8x128xf32>,
    return
  }
  func.func @transform_0(%arg0: i32) -> (i32, i32) {
    %c0_i32 = arith.constant 0 : i32
    %c0_i32_0 = arith.constant 0 : i32
    return %arg0, %c0_i32 : i32, i32
  }
  func.func @transform_1(%arg0: i32) -> (i32, i32) {
    %c0_i32 = arith.constant 0 : i32
    %c0_i32_0 = arith.constant 0 : i32
    %c0_i32_1 = arith.constant 0 : i32
    return %c0_i32, %c0_i32_0 : i32, i32
  }
  func.func @transform_2(%arg0: i32) -> (i32, i32) {
    %c0_i32 = arith.constant 0 : i32
    %c0_i32_0 = arith.constant 0 : i32
    %c0_i32_1 = arith.constant 0 : i32
    return %c0_i32, %c0_i32_0 : i32, i32
  }
  func.func @transform_3(%arg0: i32) -> (i32, i32) {
    %c0_i32 = arith.constant 0 : i32
    %c0_i32_0 = arith.constant 0 : i32
    %c0_i32_1 = arith.constant 0 : i32
    return %c0_i32, %c0_i32_0 : i32, i32
  }
  func.func @transform_4(%arg0: i32) -> (i32, i32) {
    %c0_i32 = arith.constant 0 : i32
    %c0_i32_0 = arith.constant 0 : i32
    %c0_i32_1 = arith.constant 0 : i32
    return %c0_i32, %c0_i32_0 : i32, i32
  }
  func.func @transform_5(%arg0: i32) -> (i32, i32) {
    %c0_i32 = arith.constant 0 : i32
    %c0_i32_0 = arith.constant 0 : i32
    return %arg0, %c0_i32 : i32, i32
  }
}

</mosaic_0001>

<llo_original>
// kernel: tpu_custom_call.1
$region0: #{tpu_custom_call.1}
  #allocation0 [shape = 'u32[]', space=smem, size = 0x4, offset = 0x4, fixed_abs, tag = 'smem constant byte address 0x4 - core index']
  #allocation1 [shape = 'u32[144,128]{1,0:T(1,128)}', space=vmem, size = 0x12000, scoped, tag = 'internal scratch']
  %s0 = inlined_call_operand.hbm [shape: f32[8,16], index: 0, kind: input, shape index: {}]
  %s1 = inlined_call_operand.hbm [shape: f32[16,128], index: 1, kind: input, shape index: {}]
  %s2 = inlined_call_operand.hbm [shape: f32[128,128], index: 2, kind: input, shape index: {}]
  %s3 = inlined_call_operand.hbm [shape: f32[128,128], index: 3, kind: input, shape index: {}]
  %s4 = inlined_call_operand.hbm [shape: f32[8,128], index: 4, kind: input, shape index: {}]
  %s5 = inlined_call_operand.hbm [shape: f32[8,128], index: 5, kind: output, shape index: {}]
  %s6 = sld [smem:[#allocation0]]
  $region50: #{tpu_custom_call.1} parent=0
    _
  %s8 = ssub.s32 1, %s6
  %s9 = scalar_select 0, %s8, %s6
  $region1: #{tpu_custom_call.1} parent=0
    #allocation2 [shape = 'u8[4096]{0}', space=vmem, size = 0x1000, scoped, tag = 'input window, operand 0, single buffered']
    #allocation3 [shape = 's32[1]{0}', space=sflag, size = 0x4, scoped, tag = 'scoped memory for tpu_custom_call.1']
    #allocation4 [shape = 's32[1]{0}', space=sflag, size = 0x4, scoped, tag = 'scoped memory for tpu_custom_call.1']
    #allocation5 [shape = 'u8[8192]{0}', space=vmem, size = 0x2000, scoped, tag = 'input window, operand 1, single buffered']
    #allocation6 [shape = 's32[1]{0}', space=sflag, size = 0x4, scoped, tag = 'scoped memory for tpu_custom_call.1']
    #allocation7 [shape = 'u8[65536]{0}', space=vmem, size = 0x10000, scoped, tag = 'input window, operand 2, single buffered']
    #allocation8 [shape = 'u8[65536]{0}', space=vmem, size = 0x10000, scoped, tag = 'input window, operand 3, single buffered']
    #allocation9 [shape = 's32[1]{0}', space=sflag, size = 0x4, scoped, tag = 'scoped memory for tpu_custom_call.1']
    #allocation10 [shape = 'u8[4096]{0}', space=vmem, size = 0x1000, scoped, tag = 'input window, operand 4, single buffered']
    #allocation11 [shape = 'u8[4096]{0}', space=vmem, size = 0x1000, scoped, tag = 'output window, operand 0, single buffered']
    %10 = vsyncpa [#allocation3], 0
    %11 = vsyncpa [#allocation6], 0
    %12 = vsyncpa [#allocation9], 0
    %13 = vsyncpa [#allocation4], 0
    // Predicated region
    $region2: #{tpu_custom_call.1} parent=1 // pred_check
      _
    $region3: #{tpu_custom_call.1} parent=1 // pred_check_branch
      %15 = sbr.rel (0) target = $region5
    $region4: #{tpu_custom_call.1} parent=1 // pred_region
      %s17 = ssub.s32 128, 128
      %18 = vsyncadd [#allocation3], %s17
      %s20 = sshll.u32 [#allocation2], 4
      %s21 = int_to_ptr.vmem [resolvable:$true] %s20
      %23 = dma.hbm_to_vmem [thread:$0]  %s0, 128, %s21, [#allocation3]
    $region5: #{tpu_custom_call.1} parent=1 // pred_fallthru
      _
    // Predicated region
    $region6: #{tpu_custom_call.1} parent=1 // pred_check
      _
    $region7: #{tpu_custom_call.1} parent=1 // pred_check_branch
      %25 = sbr.rel (0) target = $region9
    $region8: #{tpu_custom_call.1} parent=1 // pred_region
      %s27 = ssub.s32 256, 256
      %28 = vsyncadd [#allocation6], %s27
      %s29 = sshll.u32 [#allocation5], 4
      %s30 = int_to_ptr.vmem [resolvable:$true] %s29
      %35 = dma.hbm_to_vmem [thread:$0]  %s1, 256, %s30, [#allocation6], 128, 128, 8
    $region9: #{tpu_custom_call.1} parent=1 // pred_fallthru
      _
    // Predicated region
    $region10: #{tpu_custom_call.1} parent=1 // pred_check
      _
    $region11: #{tpu_custom_call.1} parent=1 // pred_check_branch
      %37 = sbr.rel (0) target = $region13
    $region12: #{tpu_custom_call.1} parent=1 // pred_region
      %s39 = ssub.s32 2048, 2048
      %40 = vsyncadd [#allocation6], %s39
      %s41 = sshll.u32 [#allocation7], 4
      %s42 = int_to_ptr.vmem [resolvable:$true] %s41
      %47 = dma.hbm_to_vmem [thread:$0]  %s2, 2048, %s42, [#allocation6], 128, 128, 8
    $region13: #{tpu_custom_call.1} parent=1 // pred_fallthru
      _
    // Predicated region
    $region14: #{tpu_custom_call.1} parent=1 // pred_check
      _
    $region15: #{tpu_custom_call.1} parent=1 // pred_check_branch
      %49 = sbr.rel (0) target = $region17
    $region16: #{tpu_custom_call.1} parent=1 // pred_region
      %s51 = ssub.s32 2048, 2048
      %52 = vsyncadd [#allocation9], %s51
      %s53 = sshll.u32 [#allocation8], 4
      %s54 = int_to_ptr.vmem [resolvable:$true] %s53
      %59 = dma.hbm_to_vmem [thread:$0]  %s3, 2048, %s54, [#allocation9], 128, 128, 8
    $region17: #{tpu_custom_call.1} parent=1 // pred_fallthru
      _
    // Predicated region
    $region18: #{tpu_custom_call.1} parent=1 // pred_check
      _
    $region19: #{tpu_custom_call.1} parent=1 // pred_check_branch
      %61 = sbr.rel (0) target = $region21
    $region20: #{tpu_custom_call.1} parent=1 // pred_region
      %s63 = ssub.s32 128, 128
      %64 = vsyncadd [#allocation9], %s63
      %s66 = sshll.u32 [#allocation10], 4
      %s67 = int_to_ptr.vmem [resolvable:$true] %s66
      %69 = dma.hbm_to_vmem [thread:$0]  %s4, 128, %s67, [#allocation9]
    $region21: #{tpu_custom_call.1} parent=1 // pred_fallthru
      _
    // Predicated region
    $region22: #{tpu_custom_call.1} parent=1 // pred_check
      _
    $region23: #{tpu_custom_call.1} parent=1 // pred_check_branch
      %71 = sbr.rel (0) target = $region25
    $region24: #{tpu_custom_call.1} parent=1 // pred_region
      %72 = dma.done [#allocation3], 128
    $region25: #{tpu_custom_call.1} parent=1 // pred_fallthru
      _
    // Predicated region
    $region26: #{tpu_custom_call.1} parent=1 // pred_check
      _
    $region27: #{tpu_custom_call.1} parent=1 // pred_check_branch
      %74 = sbr.rel (0) target = $region29
    $region28: #{tpu_custom_call.1} parent=1 // pred_region
      %75 = dma.done [#allocation6], 256
    $region29: #{tpu_custom_call.1} parent=1 // pred_fallthru
      _
    // Predicated region
    $region30: #{tpu_custom_call.1} parent=1 // pred_check
      _
    $region31: #{tpu_custom_call.1} parent=1 // pred_check_branch
      %77 = sbr.rel (0) target = $region33
    $region32: #{tpu_custom_call.1} parent=1 // pred_region
      %78 = dma.done [#allocation6], 2048
    $region33: #{tpu_custom_call.1} parent=1 // pred_fallthru
      _
    // Predicated region
    $region34: #{tpu_custom_call.1} parent=1 // pred_check
      _
    $region35: #{tpu_custom_call.1} parent=1 // pred_check_branch
      %80 = sbr.rel (0) target = $region37
    $region36: #{tpu_custom_call.1} parent=1 // pred_region
      %81 = dma.done [#allocation9], 2048
    $region37: #{tpu_custom_call.1} parent=1 // pred_fallthru
      _
    // Predicated region
    $region38: #{tpu_custom_call.1} parent=1 // pred_check
      _
    $region39: #{tpu_custom_call.1} parent=1 // pred_check_branch
      %83 = sbr.rel (0) target = $region41
    $region40: #{tpu_custom_call.1} parent=1 // pred_region
      %84 = dma.done [#allocation9], 128
    $region41: #{tpu_custom_call.1} parent=1 // pred_fallthru
      _
    %v85 = vld [vmem:[#allocation10] sm:$0x1]
    %v86 = vld [vmem:[#allocation10 + $0x1] sm:$0x1]
    %v87 = vld [vmem:[#allocation10 + $0x2] sm:$0x1]
    %v88 = vld [vmem:[#allocation2] sm:$0xff]
    %v89 = vld [vmem:[#allocation5] sm:$0xff]
    %v90 = vld [vmem:[#allocation5 + $0x8] sm:$0xff]
    %v91 = vlaneseq
    %v92 = vshrl.u32 %v91, 7
    %v93 = vsub.s32 0, %v92
    %v94 = vrot.slane %v85, %v93
    %vm95 = vcmask 130048
    %v97 = vsel %vm95, %v88, 0
    %99 = vmatprep.subr.mxu0 0.0
    %100 = vmatpush1.msra.mxu0 0.0
    %101 = vmatprep.subr.mxu0 0.0
    %102 = vmatpush1.msra.mxu0 0.0
    %103 = vmatprep.subr.mxu0 0.0
    %104 = vmatpush1.msra.mxu0 0.0
    %105 = vmatprep.subr.mxu0 0.0
    %106 = vmatpush1.msra.mxu0 0.0
    %107 = vmatprep.subr.mxu0 0.0
    %108 = vmatpush1.msra.mxu0 0.0
    %109 = vmatprep.subr.mxu0 0.0
    %110 = vmatpush1.msra.mxu0 0.0
    %111 = vmatprep.subr.mxu0 0.0
    %112 = vmatpush1.msra.mxu0 0.0
    %113 = vmatprep.subr.mxu0 0.0
    %114 = vmatpush1.msra.mxu0 0.0
    %115 = vmatprep.subr.mxu0 0.0
    %116 = vmatpush1.msra.mxu0 0.0
    %117 = vmatprep.subr.mxu0 0.0
    %118 = vmatpush1.msra.mxu0 0.0
    %119 = vmatprep.subr.mxu0 0.0
    %120 = vmatpush1.msra.mxu0 0.0
    %121 = vmatprep.subr.mxu0 0.0
    %122 = vmatpush1.msra.mxu0 0.0
    %123 = vmatprep.subr.mxu0 0.0
    %124 = vmatpush1.msra.mxu0 0.0
    %125 = vmatprep.subr.mxu0 0.0
    %126 = vmatpush1.msra.mxu0 0.0
    %127 = vmatprep.subr.mxu0 0.0
    %128 = vmatpush1.msra.mxu0 %v90
    %129 = vmatprep.subr.mxu0 0.0
    %130 = vmatpush1.msra.mxu0 %v89
    %131 = vmatprep.subr.mxu0 0.0
    %132 = vmatpush2.msra.mxu0 0.0
    %133 = vmatprep.subr.mxu0 0.0
    %134 = vmatpush2.msra.mxu0 0.0
    %135 = vmatprep.subr.mxu0 0.0
    %136 = vmatpush2.msra.mxu0 0.0
    %137 = vmatprep.subr.mxu0 0.0
    %138 = vmatpush2.msra.mxu0 0.0
    %139 = vmatprep.subr.mxu0 0.0
    %140 = vmatpush2.msra.mxu0 0.0
    %141 = vmatprep.subr.mxu0 0.0
    %142 = vmatpush2.msra.mxu0 0.0
    %143 = vmatprep.subr.mxu0 0.0
    %144 = vmatpush2.msra.mxu0 0.0
    %145 = vmatprep.subr.mxu0 0.0
    %146 = vmatpush2.msra.mxu0 0.0
    %147 = vmatprep.subr.mxu0 0.0
    %148 = vmatpush2.msra.mxu0 0.0
    %149 = vmatprep.subr.mxu0 0.0
    %150 = vmatpush2.msra.mxu0 0.0
    %151 = vmatprep.subr.mxu0 0.0
    %152 = vmatpush2.msra.mxu0 0.0
    %153 = vmatprep.subr.mxu0 0.0
    %154 = vmatpush2.msra.mxu0 0.0
    %155 = vmatprep.subr.mxu0 0.0
    %156 = vmatpush2.msra.mxu0 0.0
    %157 = vmatprep.subr.mxu0 0.0
    %158 = vmatpush2.msra.mxu0 0.0
    %159 = vmatprep.subr.mxu0 0.0
    %160 = vmatpush2.msra.mxu0 0.0
    %161 = vmatprep.subr.mxu0 0.0
    %162 = vmatpush2.msra.mxu0 0.0
    %163 = vmatprep.mubr.f32.mxu0 0.0
    %164 = vmatmul.mubr.f32.gmra.mxu0 %v97
    %v165 = vpop.f32.mrf.mxu0
    %v166 = vadd.f32 %v94, %v165
    %v167 = vpop.f32.mrf.mxu0
    %168 = vdwg.mxu0
    %v169 = vmax.f32 %v166, 0.0
    %v170 = vld [vmem:[#allocation7] sm:$0xff]
    %v171 = vld [vmem:[#allocation7 + $0x8] sm:$0xff]
    %v172 = vld [vmem:[#allocation7 + $0x10] sm:$0xff]
    %v173 = vld [vmem:[#allocation7 + $0x18] sm:$0xff]
    %v174 = vld [vmem:[#allocation7 + $0x20] sm:$0xff]
    %v175 = vld [vmem:[#allocation7 + $0x28] sm:$0xff]
    %v176 = vld [vmem:[#allocation7 + $0x30] sm:$0xff]
    %v177 = vld [vmem:[#allocation7 + $0x38] sm:$0xff]
    %v178 = vld [vmem:[#allocation7 + $0x40] sm:$0xff]
    %v179 = vld [vmem:[#allocation7 + $0x48] sm:$0xff]
    %v180 = vld [vmem:[#allocation7 + $0x50] sm:$0xff]
    %v181 = vld [vmem:[#allocation7 + $0x58] sm:$0xff]
    %v182 = vld [vmem:[#allocation7 + $0x60] sm:$0xff]
    %v183 = vld [vmem:[#allocation7 + $0x68] sm:$0xff]
    %v184 = vld [vmem:[#allocation7 + $0x70] sm:$0xff]
    %v185 = vld [vmem:[#allocation7 + $0x78] sm:$0xff]
    %v186 = vlaneseq
    %v187 = vshrl.u32 %v186, 7
    %v188 = vsub.s32 0, %v187
    %v189 = vrot.slane %v86, %v188
    %190 = vmatprep.subr.mxu0 0.0
    %191 = vmatpush1.msra.mxu0 %v185
    %192 = vmatprep.subr.mxu0 0.0
    %193 = vmatpush1.msra.mxu0 %v184
    %194 = vmatprep.subr.mxu0 0.0
    %195 = vmatpush1.msra.mxu0 %v183
    %196 = vmatprep.subr.mxu0 0.0
    %197 = vmatpush1.msra.mxu0 %v182
    %198 = vmatprep.subr.mxu0 0.0
    %199 = vmatpush1.msra.mxu0 %v181
    %200 = vmatprep.subr.mxu0 0.0
    %201 = vmatpush1.msra.mxu0 %v180
    %202 = vmatprep.subr.mxu0 0.0
    %203 = vmatpush1.msra.mxu0 %v179
    %204 = vmatprep.subr.mxu0 0.0
    %205 = vmatpush1.msra.mxu0 %v178
    %206 = vmatprep.subr.mxu0 0.0
    %207 = vmatpush1.msra.mxu0 %v177
    %208 = vmatprep.subr.mxu0 0.0
    %209 = vmatpush1.msra.mxu0 %v176
    %210 = vmatprep.subr.mxu0 0.0
    %211 = vmatpush1.msra.mxu0 %v175
    %212 = vmatprep.subr.mxu0 0.0
    %213 = vmatpush1.msra.mxu0 %v174
    %214 = vmatprep.subr.mxu0 0.0
    %215 = vmatpush1.msra.mxu0 %v173
    %216 = vmatprep.subr.mxu0 0.0
    %217 = vmatpush1.msra.mxu0 %v172
    %218 = vmatprep.subr.mxu0 0.0
    %219 = vmatpush1.msra.mxu0 %v171
    %220 = vmatprep.subr.mxu0 0.0
    %221 = vmatpush1.msra.mxu0 %v170
    %222 = vmatprep.subr.mxu0 0.0
    %223 = vmatpush2.msra.mxu0 0.0
    %224 = vmatprep.subr.mxu0 0.0
    %225 = vmatpush2.msra.mxu0 0.0
    %226 = vmatprep.subr.mxu0 0.0
    %227 = vmatpush2.msra.mxu0 0.0
    %228 = vmatprep.subr.mxu0 0.0
    %229 = vmatpush2.msra.mxu0 0.0
    %230 = vmatprep.subr.mxu0 0.0
    %231 = vmatpush2.msra.mxu0 0.0
    %232 = vmatprep.subr.mxu0 0.0
    %233 = vmatpush2.msra.mxu0 0.0
    %234 = vmatprep.subr.mxu0 0.0
    %235 = vmatpush2.msra.mxu0 0.0
    %236 = vmatprep.subr.mxu0 0.0
    %237 = vmatpush2.msra.mxu0 0.0
    %238 = vmatprep.subr.mxu0 0.0
    %239 = vmatpush2.msra.mxu0 0.0
    %240 = vmatprep.subr.mxu0 0.0
    %241 = vmatpush2.msra.mxu0 0.0
    %242 = vmatprep.subr.mxu0 0.0
    %243 = vmatpush2.msra.mxu0 0.0
    %244 = vmatprep.subr.mxu0 0.0
    %245 = vmatpush2.msra.mxu0 0.0
    %246 = vmatprep.subr.mxu0 0.0
    %247 = vmatpush2.msra.mxu0 0.0
    %248 = vmatprep.subr.mxu0 0.0
    %249 = vmatpush2.msra.mxu0 0.0
    %250 = vmatprep.subr.mxu0 0.0
    %251 = vmatpush2.msra.mxu0 0.0
    %252 = vmatprep.subr.mxu0 0.0
    %253 = vmatpush2.msra.mxu0 0.0
    %254 = vmatprep.mubr.f32.mxu0 0.0
    %255 = vmatmul.mubr.f32.gmra.mxu0 %v169
    %v256 = vpop.f32.mrf.mxu0
    %v257 = vadd.f32 %v189, %v256
    %v258 = vpop.f32.mrf.mxu0
    %259 = vdwg.mxu0
    %v260 = vmax.f32 %v257, 0.0
    %v261 = vld [vmem:[#allocation8] sm:$0xff]
    %v262 = vld [vmem:[#allocation8 + $0x8] sm:$0xff]
    %v263 = vld [vmem:[#allocation8 + $0x10] sm:$0xff]
    %v264 = vld [vmem:[#allocation8 + $0x18] sm:$0xff]
    %v265 = vld [vmem:[#allocation8 + $0x20] sm:$0xff]
    %v266 = vld [vmem:[#allocation8 + $0x28] sm:$0xff]
    %v267 = vld [vmem:[#allocation8 + $0x30] sm:$0xff]
    %v268 = vld [vmem:[#allocation8 + $0x38] sm:$0xff]
    %v269 = vld [vmem:[#allocation8 + $0x40] sm:$0xff]
    %v270 = vld [vmem:[#allocation8 + $0x48] sm:$0xff]
    %v271 = vld [vmem:[#allocation8 + $0x50] sm:$0xff]
    %v272 = vld [vmem:[#allocation8 + $0x58] sm:$0xff]
    %v273 = vld [vmem:[#allocation8 + $0x60] sm:$0xff]
    %v274 = vld [vmem:[#allocation8 + $0x68] sm:$0xff]
    %v275 = vld [vmem:[#allocation8 + $0x70] sm:$0xff]
    %v276 = vld [vmem:[#allocation8 + $0x78] sm:$0xff]
    %v277 = vlaneseq
    %v278 = vshrl.u32 %v277, 7
    %v279 = vsub.s32 0, %v278
    %v280 = vrot.slane %v87, %v279
    %281 = vmatprep.subr.mxu0 0.0
    %282 = vmatpush1.msra.mxu0 %v276
    %283 = vmatprep.subr.mxu0 0.0
    %284 = vmatpush1.msra.mxu0 %v275
    %285 = vmatprep.subr.mxu0 0.0
    %286 = vmatpush1.msra.mxu0 %v274
    %287 = vmatprep.subr.mxu0 0.0
    %288 = vmatpush1.msra.mxu0 %v273
    %289 = vmatprep.subr.mxu0 0.0
    %290 = vmatpush1.msra.mxu0 %v272
    %291 = vmatprep.subr.mxu0 0.0
    %292 = vmatpush1.msra.mxu0 %v271
    %293 = vmatprep.subr.mxu0 0.0
    %294 = vmatpush1.msra.mxu0 %v270
    %295 = vmatprep.subr.mxu0 0.0
    %296 = vmatpush1.msra.mxu0 %v269
    %297 = vmatprep.subr.mxu0 0.0
    %298 = vmatpush1.msra.mxu0 %v268
    %299 = vmatprep.subr.mxu0 0.0
    %300 = vmatpush1.msra.mxu0 %v267
    %301 = vmatprep.subr.mxu0 0.0
    %302 = vmatpush1.msra.mxu0 %v266
    %303 = vmatprep.subr.mxu0 0.0
    %304 = vmatpush1.msra.mxu0 %v265
    %305 = vmatprep.subr.mxu0 0.0
    %306 = vmatpush1.msra.mxu0 %v264
    %307 = vmatprep.subr.mxu0 0.0
    %308 = vmatpush1.msra.mxu0 %v263
    %309 = vmatprep.subr.mxu0 0.0
    %310 = vmatpush1.msra.mxu0 %v262
    %311 = vmatprep.subr.mxu0 0.0
    %312 = vmatpush1.msra.mxu0 %v261
    %313 = vmatprep.subr.mxu0 0.0
    %314 = vmatpush2.msra.mxu0 0.0
    %315 = vmatprep.subr.mxu0 0.0
    %316 = vmatpush2.msra.mxu0 0.0
    %317 = vmatprep.subr.mxu0 0.0
    %318 = vmatpush2.msra.mxu0 0.0
    %319 = vmatprep.subr.mxu0 0.0
    %320 = vmatpush2.msra.mxu0 0.0
    %321 = vmatprep.subr.mxu0 0.0
    %322 = vmatpush2.msra.mxu0 0.0
    %323 = vmatprep.subr.mxu0 0.0
    %324 = vmatpush2.msra.mxu0 0.0
    %325 = vmatprep.subr.mxu0 0.0
    %326 = vmatpush2.msra.mxu0 0.0
    %327 = vmatprep.subr.mxu0 0.0
    %328 = vmatpush2.msra.mxu0 0.0
    %329 = vmatprep.subr.mxu0 0.0
    %330 = vmatpush2.msra.mxu0 0.0
    %331 = vmatprep.subr.mxu0 0.0
    %332 = vmatpush2.msra.mxu0 0.0
    %333 = vmatprep.subr.mxu0 0.0
    %334 = vmatpush2.msra.mxu0 0.0
    %335 = vmatprep.subr.mxu0 0.0
    %336 = vmatpush2.msra.mxu0 0.0
    %337 = vmatprep.subr.mxu0 0.0
    %338 = vmatpush2.msra.mxu0 0.0
    %339 = vmatprep.subr.mxu0 0.0
    %340 = vmatpush2.msra.mxu0 0.0
    %341 = vmatprep.subr.mxu0 0.0
    %342 = vmatpush2.msra.mxu0 0.0
    %343 = vmatprep.subr.mxu0 0.0
    %344 = vmatpush2.msra.mxu0 0.0
    %345 = vmatprep.mubr.f32.mxu0 0.0
    %346 = vmatmul.mubr.f32.gmra.mxu0 %v260
    %v347 = vpop.f32.mrf.mxu0
    %v348 = vadd.f32 %v280, %v347
    %v349 = vpop.f32.mrf.mxu0
    %350 = vdwg.mxu0
    %351 = vst [vmem:[#allocation11] sm:$0xff] %v348
    // Predicated region
    $region42: #{tpu_custom_call.1} parent=1 // pred_check
      _
    $region43: #{tpu_custom_call.1} parent=1 // pred_check_branch
      %353 = sbr.rel (0) target = $region45
    $region44: #{tpu_custom_call.1} parent=1 // pred_region
      %s355 = ssub.s32 128, 128
      %356 = vsyncadd [#allocation4], %s355
      %s358 = sshll.u32 [#allocation11], 4
      %s359 = int_to_ptr.vmem [resolvable:$true] %s358
      %361 = dma.vmem_to_hbm [thread:$0]  %s359, 128, %s5, [#allocation4]
    $region45: #{tpu_custom_call.1} parent=1 // pred_fallthru
      _
    // Predicated region
    $region46: #{tpu_custom_call.1} parent=1 // pred_check
      _
    $region47: #{tpu_custom_call.1} parent=1 // pred_check_branch
      %363 = sbr.rel (0) target = $region49
    $region48: #{tpu_custom_call.1} parent=1 // pred_region
      %364 = dma.done [#allocation4], 128
    $region49: #{tpu_custom_call.1} parent=1 // pred_fallthru
      _
    %365 = vsyncpa [#allocation3], 1
    %366 = vsyncpa [#allocation6], 1
    %367 = vsyncpa [#allocation9], 1
    %368 = vsyncpa [#allocation4], 1

</llo_original>
